<compile_context>
chip_gen: v7x
topology: tpu7x:2x2x1
jax: 0.10.0
libtpu: 0.0.40
codegen_flags: <defaults>
</compile_context>

<pallas_src>
import jax
import jax.numpy as jnp
from jax.experimental import pallas as pl
from jax.experimental.pallas import tpu as pltpu

_LANES = 128


def _h_swish_kernel(x_ref, o_ref):
    x = x_ref[...].astype(jnp.float32)
    hs = jnp.clip(x + 3.0, 0.0, 6.0) * (1.0 / 6.0)
    # Guard x <= -3 so -inf maps to 0 (matches torch hardswish), not NaN.
    y = jnp.where(x <= -3.0, 0.0, x * hs)
    o_ref[...] = y.astype(o_ref.dtype)


def _h_swish_math(x):
    """Plain-jnp tail / reference math (same semantics as the kernel)."""
    xf = x.astype(jnp.float32)
    hs = jnp.clip(xf + 3.0, 0.0, 6.0) * (1.0 / 6.0)
    return jnp.where(xf <= -3.0, 0.0, xf * hs).astype(x.dtype)


def _chip_tuning():
    """(block_bytes, vmem_limit_bytes or None, dimension_semantics) per chip."""
    kind = ""
    try:
        kind = jax.devices()[0].device_kind.lower()
    except Exception:  # pragma: no cover - defensive; fall back to conservative
        pass
    if "v7" in kind or "7x" in kind:
        # v7x: 3.2 TB/s HBM -> amortize per-step overhead with big blocks;
        # 4 bufs x 8 MiB = 32 MiB, so raise scoped VMEM (64 MiB physical).
        return 8 << 20, 48 << 20, (pltpu.CORE_PARALLEL,)
    if "v6" in kind:
        # v6e: 16 MiB footprint fits the 32 MiB scoped default untouched.
        return 4 << 20, None, ("parallel",)
    # v5e / unknown: conservative -- 8 MiB footprint under 16 MiB scoped VMEM.
    return 2 << 20, None, ("parallel",)


def h_swish(x: jax.Array, *, block_rows: int | None = None) -> jax.Array:
    """Hard-swish, elementwise.  Accepts any shape (e.g. NCHW)."""
    orig_shape = x.shape
    dtype = x.dtype
    total = x.size
    itemsize = jnp.dtype(dtype).itemsize

    # Native sublane packing: 8 rows for 32-bit, 16 for bf16, 32 for int8/fp8.
    pack = max(8, 32 // itemsize)

    x_flat = jnp.ravel(x)
    rows = total // _LANES
    rem = total - rows * _LANES

    if rows == 0:
        # Fewer than 128 elements: no kernel win possible, plain jnp.
        return _h_swish_math(x_flat).reshape(orig_shape)

    block_bytes, vmem_limit, dim_sem = _chip_tuning()
    if block_rows is None:
        block_rows = max(pack, (block_bytes // (_LANES * itemsize)) // pack * pack)
    tile_r = min(block_rows, rows)  # rows < tile_r -> full-array block (legal)

    grid = (pl.cdiv(rows, tile_r),)  # partial last block is masked by Pallas

    bulk = rows * _LANES
    x2d = x_flat[:bulk].reshape(rows, _LANES)

    cost = pl.CostEstimate(
        flops=6 * bulk,            # add, 2x clamp cmp/sel, mul, mul, where
        transcendentals=0,
        bytes_accessed=2 * bulk * itemsize,
    )

    out2d = pl.pallas_call(
        _h_swish_kernel,
        out_shape=jax.ShapeDtypeStruct((rows, _LANES), dtype),
        grid=grid,
        in_specs=[pl.BlockSpec((tile_r, _LANES), lambda i: (i, 0))],
        out_specs=pl.BlockSpec((tile_r, _LANES), lambda i: (i, 0)),
        compiler_params=pltpu.CompilerParams(
            dimension_semantics=dim_sem,
            vmem_limit_bytes=vmem_limit,
        ),
        cost_estimate=cost,
    )(x2d)

    out_flat = out2d.reshape(-1)
    if rem:
        # <128-element tail handled with plain jnp (no whole-array pad+slice).
        tail = _h_swish_math(x_flat[bulk:])
        out_flat = jnp.concatenate([out_flat, tail])
    return out_flat.reshape(orig_shape)


if __name__ == "__main__":
    key = jax.random.PRNGKey(0)

    # NCHW, matching the PyTorch module's typical use (lane-divisible fast path).
    x = jax.random.normal(key, (2, 4, 16, 16), dtype=jnp.float32) * 4.0
    out = jax.block_until_ready(h_swish(x))
    ref = _h_swish_math(x)
    assert out.shape == x.shape and out.dtype == x.dtype
    assert jnp.allclose(out, ref, atol=1e-6, rtol=1e-6), "mismatch (f32)"

    # Lane-divisible but not pack-divisible rows + forced small block:
    # exercises the masked partial last block (no pad fallback anymore).
    x_mask = jax.random.normal(jax.random.PRNGKey(2), (2, 4, 16, 20),
                               dtype=jnp.float32) * 4.0  # 2560 elems = 20 rows
    out_mask = jax.block_until_ready(h_swish(x_mask, block_rows=8))
    assert jnp.allclose(out_mask, _h_swish_math(x_mask), atol=1e-6, rtol=1e-6), \
        "mismatch (masked last block)"

    # Odd element count exercises the bulk-prefix + jnp-tail path.
    x_odd = jax.random.normal(jax.random.PRNGKey(1), (3, 5, 7, 11),
                              dtype=jnp.float32) * 4.0
    out_odd = jax.block_until_ready(h_swish(x_odd))
    assert out_odd.shape == x_odd.shape and out_odd.dtype == x_odd.dtype
    assert jnp.allclose(out_odd, _h_swish_math(x_odd), atol=1e-6, rtol=1e-6), \
        "mismatch (odd size)"

    # bf16 path (pack=16, in-kernel f32 compute).
    x_bf = (jax.random.normal(jax.random.PRNGKey(3), (2, 4, 16, 16)) * 4.0
            ).astype(jnp.bfloat16)
    out_bf = jax.block_until_ready(h_swish(x_bf))
    assert out_bf.dtype == jnp.bfloat16
    assert jnp.allclose(out_bf.astype(jnp.float32),
                        _h_swish_math(x_bf).astype(jnp.float32),
                        atol=3e-2, rtol=3e-2), "mismatch (bf16)"

    # Infinity parity with torch hardswish: h_swish(-inf) == 0, h_swish(inf) == inf.
    x_edge = jnp.zeros((8, _LANES), jnp.float32)
    x_edge = x_edge.at[0, 0].set(-jnp.inf).at[0, 1].set(jnp.inf)
    x_edge = x_edge.at[0, 2].set(-5.0).at[0, 3].set(5.0)
    out_edge = jax.block_until_ready(h_swish(x_edge))
    assert out_edge[0, 0] == 0.0
    assert jnp.isposinf(out_edge[0, 1])
    assert not jnp.any(jnp.isnan(out_edge)), "NaN leaked from inf handling"

    print("KERNEL_OK")
</pallas_src>

<mosaic_0001>
module attributes {stable_mosaic.version = 11 : i64} {
  func.func @_h_swish_kernel(%arg0: i32, %arg1: memref<16x128xf32, #tpu.memory_space<vmem>>, %arg2: memref<16x128xf32, #tpu.memory_space<vmem>>) attributes {dimension_semantics = [#tpu.dimension_semantics<parallel>], iteration_bounds = array<i64: 1>, scalar_prefetch = 0 : i64, scratch_operands = 0 : i64, tpu.core_type = #tpu.core_type<tc>, window_params = [{transform_indices = @transform_0, window_bounds = array<i64: 16, 128>}, {transform_indices = @transform_1, window_bounds = array<i64: 16, 128>}]} {
    %c0 = arith.constant 0 : index
    %c0_0 = arith.constant 0 : index
    %0 = vector.load %arg1[%c0, %c0_0] : memref<16x128xf32, #tpu.memory_space<vmem>>, vector<16x128xf32>
    %cst = arith.constant 3.000000e+00 : f32
    %1 = vector.broadcast %cst : f32 to vector<16x128xf32>
    %2 = arith.addf %0, %1 : vector<16x128xf32>
    %cst_1 = arith.constant 0.000000e+00 : f32
    %cst_2 = arith.constant 6.000000e+00 : f32
    %3 = vector.broadcast %cst_1 : f32 to vector<16x128xf32>
    %4 = arith.maximumf %3, %2 : vector<16x128xf32>
    %5 = vector.broadcast %cst_2 : f32 to vector<16x128xf32>
    %6 = arith.minimumf %5, %4 : vector<16x128xf32>
    %cst_3 = arith.constant 0.166666672 : f32
    %7 = vector.broadcast %cst_3 : f32 to vector<16x128xf32>
    %8 = arith.mulf %6, %7 : vector<16x128xf32>
    %cst_4 = arith.constant -3.000000e+00 : f32
    %9 = vector.broadcast %cst_4 : f32 to vector<16x128xf32>
    %10 = arith.cmpf ole, %0, %9 : vector<16x128xf32>
    %11 = arith.mulf %0, %8 : vector<16x128xf32>
    %cst_5 = arith.constant 0.000000e+00 : f32
    %12 = vector.broadcast %cst_5 : f32 to vector<16x128xf32>
    %13 = arith.select %10, %12, %11 : vector<16x128xi1>, vector<16x128xf32>
    %c0_6 = arith.constant 0 : index
    %c0_7 = arith.constant 0 : index
    %14 = vector.load %arg2[%c0_6, %c0_7] : memref<16x128xf32, #tpu.memory_space<vmem>>, vector<16x128xf32>
    tpu.vector_store %arg2[%c0_6, %c0_7], %13 {strides = array<i32>} : memref<16x128xf32, #tpu.memory_space<vmem>>, vector<16x128xf32>,
    return
  }
  func.func @transform_0(%arg0: i32) -> (i32, i32) {
    %c0_i32 = arith.constant 0 : i32
    %c0_i32_0 = arith.constant 0 : i32
    return %arg0, %c0_i32 : i32, i32
  }
  func.func @transform_1(%arg0: i32) -> (i32, i32) {
    %c0_i32 = arith.constant 0 : i32
    %c0_i32_0 = arith.constant 0 : i32
    return %arg0, %c0_i32 : i32, i32
  }
}

</mosaic_0001>

<llo_original>
// kernel: tpu_custom_call.1
$region0: #{tpu_custom_call.1}
  #allocation0 [shape = 'u32[]', space=smem, size = 0x4, offset = 0x4, fixed_abs, tag = 'smem constant byte address 0x4 - core index']
  #allocation1 [shape = 'u32[144,128]{1,0:T(1,128)}', space=vmem, size = 0x12000, scoped, tag = 'internal scratch']
  %s0 = inlined_call_operand.hbm [shape: f32[16,128], index: 0, kind: input, shape index: {}]
  %s1 = inlined_call_operand.hbm [shape: f32[16,128], index: 1, kind: output, shape index: {}]
  %s2 = sld [smem:[#allocation0]]
  $region18: #{tpu_custom_call.1} parent=0
    _
  %s4 = ssub.s32 1, %s2
  %s5 = scalar_select 0, %s4, %s2
  $region1: #{tpu_custom_call.1} parent=0
    #allocation2 [shape = 'u8[8192]{0}', space=vmem, size = 0x2000, scoped, tag = 'input window, operand 0, single buffered']
    #allocation3 [shape = 's32[1]{0}', space=sflag, size = 0x4, scoped, tag = 'scoped memory for tpu_custom_call.1']
    #allocation4 [shape = 's32[1]{0}', space=sflag, size = 0x4, scoped, tag = 'scoped memory for tpu_custom_call.1']
    #allocation5 [shape = 'u8[8192]{0}', space=vmem, size = 0x2000, scoped, tag = 'output window, operand 0, single buffered']
    %6 = vsyncpa [#allocation3], 0
    %7 = vsyncpa [#allocation4], 0
    // Predicated region
    $region2: #{tpu_custom_call.1} parent=1 // pred_check
      _
    $region3: #{tpu_custom_call.1} parent=1 // pred_check_branch
      %9 = sbr.rel (0) target = $region5
    $region4: #{tpu_custom_call.1} parent=1 // pred_region
      %s11 = ssub.s32 256, 256
      %12 = vsyncadd [#allocation3], %s11
      %s13 = sshll.u32 [#allocation2], 4
      %s14 = int_to_ptr.vmem [resolvable:$true] %s13
      %19 = dma.hbm_to_vmem [thread:$0]  %s0, 256, %s14, [#allocation3], 128, 128, 8
    $region5: #{tpu_custom_call.1} parent=1 // pred_fallthru
      _
    // Predicated region
    $region6: #{tpu_custom_call.1} parent=1 // pred_check
      _
    $region7: #{tpu_custom_call.1} parent=1 // pred_check_branch
      %21 = sbr.rel (0) target = $region9
    $region8: #{tpu_custom_call.1} parent=1 // pred_region
      %22 = dma.done [#allocation3], 256
    $region9: #{tpu_custom_call.1} parent=1 // pred_fallthru
      _
    %v23 = vld [vmem:[#allocation2] sm:$0xff]
    %v24 = vld [vmem:[#allocation2 + $0x8] sm:$0xff]
    %v25 = vadd.f32 %v23, 3.0
    %v26 = vadd.f32 %v24, 3.0
    %v27 = vmax.f32 %v25, 0.0
    %v28 = vmax.f32 %v26, 0.0
    %v29 = vmin.f32 %v27, 6.0
    %v30 = vmin.f32 %v28, 6.0
    %v31 = vmul.f32 %v29, 0.16666667
    %v32 = vmul.f32 %v30, 0.16666667
    %vm33 = vcmp.le.f32.partialorder %v23, -3.0
    %vm34 = vcmp.le.f32.partialorder %v24, -3.0
    %v35 = vmul.f32 %v23, %v31
    %v36 = vmul.f32 %v24, %v32
    %v37 = vsel %vm33, 0.0, %v35
    %v38 = vsel %vm34, 0.0, %v36
    %39 = vst [vmem:[#allocation5] sm:$0xff] %v37
    %40 = vst [vmem:[#allocation5 + $0x8] sm:$0xff] %v38
    // Predicated region
    $region10: #{tpu_custom_call.1} parent=1 // pred_check
      _
    $region11: #{tpu_custom_call.1} parent=1 // pred_check_branch
      %42 = sbr.rel (0) target = $region13
    $region12: #{tpu_custom_call.1} parent=1 // pred_region
      %s44 = ssub.s32 256, 256
      %45 = vsyncadd [#allocation4], %s44
      %s46 = sshll.u32 [#allocation5], 4
      %s47 = int_to_ptr.vmem [resolvable:$true] %s46
      %52 = dma.vmem_to_hbm [thread:$0]  %s47, 256, %s1, [#allocation4], 128, 128, 8
    $region13: #{tpu_custom_call.1} parent=1 // pred_fallthru
      _
    // Predicated region
    $region14: #{tpu_custom_call.1} parent=1 // pred_check
      _
    $region15: #{tpu_custom_call.1} parent=1 // pred_check_branch
      %54 = sbr.rel (0) target = $region17
    $region16: #{tpu_custom_call.1} parent=1 // pred_region
      %55 = dma.done [#allocation4], 256
    $region17: #{tpu_custom_call.1} parent=1 // pred_fallthru
      _
    %56 = vsyncpa [#allocation3], 1
    %57 = vsyncpa [#allocation4], 1

</llo_original>
